<compile_context>
chip_gen: v7x
topology: tpu7x:2x2x1
jax: 0.10.0
libtpu: 0.0.40
codegen_flags: <defaults>
</compile_context>

<pallas_src>
import functools

import jax
import jax.numpy as jnp
from jax.experimental import pallas as pl
from jax.experimental.pallas import tpu as pltpu


def _round_up(x, m):
    return -(-x // m) * m


def _auto_n_split(R):
    """2-way grid split only on chips with 2 TensorCores (v7x); else 1."""
    try:
        kind = jax.devices()[0].device_kind.lower()
    except Exception:
        return 1
    two_tc = "v7" in kind          # v5e / v6e have a single TensorCore
    return 2 if (two_tc and R >= 256) else 1


def _choose_tiling(R, tl_max, n_split):
    """Balanced tiling: both splits get the same number of TL-wide tiles."""
    cols_per_split = _round_up(_round_up(R, n_split) // n_split, 128)
    TL = min(tl_max, cols_per_split)
    tiles_per_split = -(-cols_per_split // TL)
    return TL, tiles_per_split


def _yolo_loss_kernel(p_ref, t_ref, out_ref, anc_ref, *,
                      B, C, G, Cp8, anchors_w, anchors_h,
                      object_scale, no_object_scale, coord_scale, class_scale,
                      n_cols, tiles_per_split):
    sp = pl.program_id(0)          # split axis  ("parallel": 2 TCs on v7x)
    k = pl.program_id(1)           # column-tile ("arbitrary": accumulation)
    tl = p_ref.shape[-1]

    @pl.when(k == 0)
    def _init():
        # zero the per-split lane accumulator
        out_ref[...] = jnp.zeros_like(out_ref)
        # hoisted anchor (w|h) column: built once per split, not per step
        row = jax.lax.broadcasted_iota(jnp.int32, (2 * G, 1), 0)
        anc = jnp.zeros((2 * G, 1), jnp.float32)
        for b in range(B):
            anc = jnp.where(row == b, float(anchors_w[b]), anc)
            anc = jnp.where(row == G + b, float(anchors_h[b]), anc)
        anc_ref[...] = anc

    pred = p_ref[...].astype(jnp.float32)      # (5G + Cp8, TL), 8-row aligned
    targ = t_ref[...].astype(jnp.float32)

    # ---- decode: ONE wide sigmoid over [x|y|conf], ONE exp(tanh) over [w|h]
    sig = jax.nn.sigmoid(pred[:3 * G, :])                      # (3G, TL)
    px, py, pc = sig[:G], sig[G:2 * G], sig[2 * G:3 * G]
    pwh = jnp.exp(jnp.tanh(pred[3 * G:5 * G, :])) * anc_ref[...]
    pw, ph = pwh[:G], pwh[G:2 * G]

    tx, ty, tc = targ[:G], targ[G:2 * G], targ[2 * G:3 * G]
    tw, th = targ[3 * G:4 * G], targ[4 * G:5 * G]
    logits = pred[5 * G:5 * G + Cp8, :]
    cls_t = targ[5 * G:5 * G + Cp8, :]

    # ---- validity masks (padded lanes + padded sublane rows)
    col = (jax.lax.broadcasted_iota(jnp.int32, (1, tl), 1)
           + (sp * tiles_per_split + k) * tl)
    valid = col < n_cols                                       # (1, TL)
    box_valid = jax.lax.broadcasted_iota(jnp.int32, (G, 1), 0) < B
    cls_valid = jax.lax.broadcasted_iota(jnp.int32, (Cp8, 1), 0) < C

    conf_sum = jnp.sum(tc, axis=0, keepdims=True)              # (1, TL)
    coord = (conf_sum > 0.0) & valid                           # object cells
    noobj = (conf_sum == 0.0) & valid                          # empty cells

    # ---- no-object confidence loss
    noobj_terms = jnp.where(noobj & box_valid, (pc - tc) ** 2, 0.0)      # (G, TL)

    # ---- class loss (softmax over valid class rows, coord cells only)
    m = jnp.max(jnp.where(cls_valid, logits, -1e30), axis=0, keepdims=True)
    e = jnp.where(cls_valid, jnp.exp(logits - m), 0.0)
    soft = e * pl.reciprocal(jnp.sum(e, axis=0, keepdims=True), approx=True)
    cls_terms = jnp.where(coord & cls_valid, (soft - cls_t) ** 2, 0.0)   # (Cp8, TL)

    # ---- responsible box: first argmax of target conf, only if that conf == 1
    idx = jax.lax.broadcasted_iota(jnp.int32, (G, tl), 0)
    is_max = tc == jnp.max(tc, axis=0, keepdims=True)
    first_max = idx == jnp.min(jnp.where(is_max, idx, G), axis=0, keepdims=True)
    resp = first_max & (tc == 1.0) & coord                     # (G, TL)

    # ---- IoU in pixel space (cell = 32 px, image = 448 px)
    p_x0 = px * 32.0 - pw * 224.0
    p_y0 = py * 32.0 - ph * 224.0
    p_x1 = px * 32.0 + pw * 224.0
    p_y1 = py * 32.0 + ph * 224.0
    t_x0 = tx * 32.0 - tw * 224.0
    t_y0 = ty * 32.0 - th * 224.0
    t_x1 = tx * 32.0 + tw * 224.0
    t_y1 = ty * 32.0 + th * 224.0
    p_area = (p_x1 - p_x0) * (p_y1 - p_y0)
    t_area = (t_x1 - t_x0) * (t_y1 - t_y0)
    inter = (jnp.minimum(p_x1, t_x1) - jnp.maximum(p_x0, t_x0)) * \
            (jnp.minimum(p_y1, t_y1) - jnp.maximum(p_y0, t_y0))
    iou = inter * pl.reciprocal(p_area + t_area - inter + 1e-6, approx=True)
    no_overlap = ((p_x0 - t_x1) >= 0.0) | ((t_x0 - p_x1) >= 0.0) | \
                 ((t_y0 - p_y1) >= 0.0) | ((p_y0 - t_y1) >= 0.0)
    iou = jnp.where(no_overlap, 0.0, iou)

    # ---- coordinate + object-confidence losses (select-masked, NaN-safe)
    xywh_terms = jnp.where(resp, (px - tx) ** 2 + (py - ty) ** 2
                           + (pw - tw) ** 2 + (ph - th) ** 2, 0.0)
    conf_terms = jnp.where(resp, (pc - iou) ** 2, 0.0)

    box_contrib = (coord_scale * xywh_terms
                   + object_scale * conf_terms
                   + no_object_scale * noobj_terms)            # (G, TL)

    # ---- single fused cross-sublane reduction over box + class terms
    all_terms = jnp.concatenate([box_contrib, class_scale * cls_terms], axis=0)
    contrib = jnp.sum(all_terms, axis=0, keepdims=True)        # (1, TL)
    out_ref[...] += contrib[None]                              # (1, 1, TL)


class LossFunctionPallas:
    def __init__(self, S, B, C, object_scale, no_object_scale, coord_scale,
                 class_scale, tile_cols=2048, n_split=None):
        assert B == 5, "_gen_mask in the reference module implicitly requires B == 5"
        self.S, self.B, self.C = S, B, C
        self.C_predict = B * 5 + C
        self.B_predict = B * 5
        self.object_scale = float(object_scale)
        self.no_object_scale = float(no_object_scale)
        self.coord_scale = float(coord_scale)
        self.class_scale = float(class_scale)
        self.tile_cols = max(128, (int(tile_cols) // 128) * 128)
        self.n_split = n_split            # None -> auto (2 on v7x, else 1)
        self._jitted = {}

    def __call__(self, predicts, target, anchor_box):
        anchors = tuple((float(a[0]), float(a[1])) for a in anchor_box)
        key = (tuple(predicts.shape), str(predicts.dtype), str(target.dtype),
               anchors)
        fn = self._jitted.get(key)
        if fn is None:
            fn = self._build(tuple(predicts.shape), anchors)
            self._jitted[key] = fn
        return fn(predicts, target)

    def _build(self, shape, anchors):
        N, S, S2, Cp = shape
        assert S == self.S and S2 == self.S and Cp == self.C_predict
        B, C = self.B, self.C
        R = N * S * S
        G = _round_up(B, 8)               # 8-row aligned box-field groups
        Cp8 = _round_up(C, 8)             # 8-row aligned class group
        Crows = 5 * G + Cp8

        n_split = self.n_split if self.n_split is not None else _auto_n_split(R)
        n_split = max(1, min(2, int(n_split)))
        TL, tiles_per_split = _choose_tiling(R, self.tile_cols, n_split)
        R_pad = n_split * tiles_per_split * TL

        anchors_w = tuple(a[0] for a in anchors)
        anchors_h = tuple(a[1] for a in anchors)

        kernel = functools.partial(
            _yolo_loss_kernel,
            B=B, C=C, G=G, Cp8=Cp8,
            anchors_w=anchors_w, anchors_h=anchors_h,
            object_scale=self.object_scale,
            no_object_scale=self.no_object_scale,
            coord_scale=self.coord_scale,
            class_scale=self.class_scale,
            n_cols=R, tiles_per_split=tiles_per_split)

        in_spec = pl.BlockSpec((Crows, TL),
                               lambda p, k: (0, p * tiles_per_split + k))
        out_spec = pl.BlockSpec((1, 1, TL), lambda p, k: (p, 0, 0))

        call = pl.pallas_call(
            kernel,
            out_shape=jax.ShapeDtypeStruct((n_split, 1, TL), jnp.float32),
            grid_spec=pltpu.PrefetchScalarGridSpec(
                num_scalar_prefetch=0,
                grid=(n_split, tiles_per_split),
                in_specs=[in_spec, in_spec],
                out_specs=out_spec,
                scratch_shapes=[pltpu.VMEM((2 * G, 1), jnp.float32)]),
            compiler_params=pltpu.CompilerParams(
                dimension_semantics=("parallel", "arbitrary")),
        )

        field_order = jnp.array((0, 1, 4, 2, 3), jnp.int32)   # x, y, conf, w, h

        def pack(x):
            # (N,S,S,Cp) -> lane-dense field-major slab (Crows, R_pad),
            # 8-row aligned groups. Fused into the jitted forward pass.
            x = x.reshape(R, Cp)
            box = x[:, :5 * B].reshape(R, B, 5)
            boxT = jnp.transpose(box, (2, 1, 0))               # (5, B, R)
            boxT = jnp.take(boxT, field_order, axis=0)
            boxT = jnp.pad(boxT, ((0, 0), (0, G - B), (0, 0))) # (5, G, R)
            cls = jnp.pad(jnp.transpose(x[:, 5 * B:], (1, 0)),
                          ((0, Cp8 - C), (0, 0)))              # (Cp8, R)
            slab = jnp.concatenate([boxT.reshape(5 * G, R), cls], axis=0)
            if R_pad != R:
                slab = jnp.pad(slab, ((0, 0), (0, R_pad - R)))
            return slab

        @jax.jit
        def forward(predicts, target):
            partials = call(pack(predicts), pack(target))
            # one cheap cross-lane reduction + normalization outside the kernel
            return jnp.sum(partials) / N

        return forward


def _reference_loss(predicts, target, anchor_box, B, C,
                    object_scale, no_object_scale, coord_scale, class_scale):
    """Pure-JAX mirror of the PyTorch forward pass (for validation)."""
    N = predicts.shape[0]
    Bp = B * 5
    Cp = Bp + C
    p = predicts.reshape(-1, Cp).astype(jnp.float32)
    t = target.reshape(-1, Cp).astype(jnp.float32)
    pbox = p[:, :Bp].reshape(-1, B, 5)
    tbox = t[:, :Bp].reshape(-1, B, 5)
    anchors = jnp.asarray(anchor_box, jnp.float32).reshape(B, 2)

    px = jax.nn.sigmoid(pbox[:, :, 0])
    py = jax.nn.sigmoid(pbox[:, :, 1])
    pw = jnp.exp(jnp.tanh(pbox[:, :, 2])) * anchors[None, :, 0]
    ph = jnp.exp(jnp.tanh(pbox[:, :, 3])) * anchors[None, :, 1]
    pc = jax.nn.sigmoid(pbox[:, :, 4])
    tx, ty, tw, th, tc = (tbox[:, :, k] for k in range(5))

    conf_sum = tc.sum(-1)
    coord = conf_sum > 0.0
    noobj = conf_sum == 0.0

    noobj_loss = jnp.sum(jnp.where(noobj[:, None], (pc - tc) ** 2, 0.0))

    logits = p[:, Bp:]
    m = jnp.max(logits, axis=-1, keepdims=True)
    e = jnp.exp(logits - m)
    soft = e / jnp.sum(e, axis=-1, keepdims=True)
    class_loss = jnp.sum(jnp.where(coord[:, None], (soft - t[:, Bp:]) ** 2, 0.0))

    idx = jnp.arange(B)[None, :]
    is_max = tc == jnp.max(tc, axis=-1, keepdims=True)
    first_max = idx == jnp.min(jnp.where(is_max, idx, B), axis=-1, keepdims=True)
    resp = (first_max & (tc == 1.0) & coord[:, None]).astype(jnp.float32)

    p_x0 = px * 32.0 - 0.5 * pw * 448.0
    p_y0 = py * 32.0 - 0.5 * ph * 448.0
    p_x1 = px * 32.0 + 0.5 * pw * 448.0
    p_y1 = py * 32.0 + 0.5 * ph * 448.0
    t_x0 = tx * 32.0 - 0.5 * tw * 448.0
    t_y0 = ty * 32.0 - 0.5 * th * 448.0
    t_x1 = tx * 32.0 + 0.5 * tw * 448.0
    t_y1 = ty * 32.0 + 0.5 * th * 448.0
    p_area = (p_x1 - p_x0) * (p_y1 - p_y0)
    t_area = (t_x1 - t_x0) * (t_y1 - t_y0)
    inter = (jnp.minimum(p_x1, t_x1) - jnp.maximum(p_x0, t_x0)) * \
            (jnp.minimum(p_y1, t_y1) - jnp.maximum(p_y0, t_y0))
    iou = inter / (p_area + t_area - inter + 1e-6)
    no_overlap = ((p_x0 - t_x1) >= 0.0) | ((t_x0 - p_x1) >= 0.0) | \
                 ((t_y0 - p_y1) >= 0.0) | ((p_y0 - t_y1) >= 0.0)
    iou = jnp.where(no_overlap, 0.0, iou)

    xy_loss = jnp.sum(resp * ((px - tx) ** 2 + (py - ty) ** 2))
    wh_loss = jnp.sum(resp * ((pw - tw) ** 2 + (ph - th) ** 2))
    conf_loss = jnp.sum(jnp.where(resp > 0, (pc - iou) ** 2, 0.0))

    total = (coord_scale * (xy_loss + wh_loss) + object_scale * conf_loss
             + no_object_scale * noobj_loss + class_scale * class_loss)
    return total / N


if __name__ == "__main__":
    # Small deterministic example: N=2, S=13 grid (448-px YOLOv2), B=5, C=3.
    N, S, B, C = 2, 13, 5, 3
    Cp = B * 5 + C

    key = jax.random.PRNGKey(0)
    k1, k2, k3, k4, k5, k6 = jax.random.split(key, 6)

    predicts = jax.random.normal(k1, (N, S, S, Cp), dtype=jnp.float32)

    # Plausible YOLO target: some cells contain an object (one box with
    # confidence 1), the rest are empty; one-hot classes.
    obj = jax.random.bernoulli(k2, 0.5, (N, S, S)).astype(jnp.float32)
    resp_idx = jax.random.randint(k3, (N, S, S), 0, B)
    conf = jax.nn.one_hot(resp_idx, B, dtype=jnp.float32) * obj[..., None]
    xy = jax.random.uniform(k4, (N, S, S, B, 2), dtype=jnp.float32)
    wh = jax.random.uniform(k5, (N, S, S, B, 2), dtype=jnp.float32,
                            minval=0.05, maxval=0.5)
    tbox = jnp.concatenate([xy, wh, conf[..., None]], axis=-1)       # (N,S,S,B,5)
    cls_idx = jax.random.randint(k6, (N, S, S), 0, C)
    cls = jax.nn.one_hot(cls_idx, C, dtype=jnp.float32)
    target = jnp.concatenate([tbox.reshape(N, S, S, B * 5), cls], axis=-1)

    # Deterministic anchor boxes (B, 2) — normalized (w, h) priors.
    anchor_box = [[0.05, 0.07], [0.12, 0.15], [0.22, 0.30],
                  [0.35, 0.20], [0.60, 0.45]]

    ref = _reference_loss(predicts, target, anchor_box, B, C,
                          object_scale=5.0, no_object_scale=0.5,
                          coord_scale=5.0, class_scale=1.0)
    ref = float(jax.block_until_ready(ref))

    # Config 1 exercises multi-tile accumulation + forced 2-way split + padding;
    # config 2 is the default big-tile path with auto TensorCore split.
    configs = [dict(tile_cols=128, n_split=2),
               dict(tile_cols=2048, n_split=None)]
    for cfg in configs:
        lossfn = LossFunctionPallas(S=S, B=B, C=C,
                                    object_scale=5.0, no_object_scale=0.5,
                                    coord_scale=5.0, class_scale=1.0, **cfg)
        loss = jax.block_until_ready(lossfn(predicts, target, anchor_box))
        assert jnp.isfinite(loss), "non-finite loss"
        # 2e-3 relative tolerance: covers the approx-reciprocal softmax / IoU
        # denominators recommended by the perf review (typical error << 1e-3).
        assert abs(float(loss) - ref) <= 2e-3 + 2e-3 * abs(ref), \
            f"mismatch ({cfg}): kernel={float(loss)} ref={ref}"

    print("KERNEL_OK")
</pallas_src>

<mosaic_0001>
module attributes {stable_mosaic.version = 11 : i64} {
  func.func @_yolo_loss_kernel(%arg0: i32, %arg1: i32, %arg2: memref<48x128xf32, #tpu.memory_space<vmem>>, %arg3: memref<48x128xf32, #tpu.memory_space<vmem>>, %arg4: memref<1x1x128xf32, #tpu.memory_space<vmem>>, %arg5: memref<16x1xf32, #tpu.memory_space<vmem>>) attributes {dimension_semantics = [#tpu.dimension_semantics<parallel>, #tpu.dimension_semantics<arbitrary>], iteration_bounds = array<i64: 2, 2>, scalar_prefetch = 0 : i64, scratch_operands = 1 : i64, tpu.core_type = #tpu.core_type<tc>, window_params = [{transform_indices = @transform_0, window_bounds = array<i64: 48, 128>}, {transform_indices = @transform_1, window_bounds = array<i64: 48, 128>}, {transform_indices = @transform_2, window_bounds = array<i64: 1, 1, 128>}]} {
    %c0_i32 = arith.constant 0 : i32
    %0 = arith.cmpi eq, %arg1, %c0_i32 : i32
    %1 = arith.extui %0 : i1 to i32
    %c0_i32_0 = arith.constant 0 : i32
    %2 = arith.cmpi ne, %1, %c0_i32_0 : i32
    scf.if %2 {
      %cst_53 = arith.constant 0.000000e+00 : f32
      %209 = vector.broadcast %cst_53 : f32 to vector<1x1x128xf32>
      %c0_54 = arith.constant 0 : index
      %c0_55 = arith.constant 0 : index
      %c0_56 = arith.constant 0 : index
      %210 = vector.load %arg4[%c0_54, %c0_55, %c0_56] : memref<1x1x128xf32, #tpu.memory_space<vmem>>, vector<1x1x128xf32>
      tpu.vector_store %arg4[%c0_54, %c0_55, %c0_56], %209 {strides = array<i32>} : memref<1x1x128xf32, #tpu.memory_space<vmem>>, vector<1x1x128xf32>,
      %211 = tpu.iota {dimensions = array<i32: 0>} : vector<16x1xi32>
      %cst_57 = arith.constant 0.000000e+00 : f32
      %212 = vector.broadcast %cst_57 : f32 to vector<16x1xf32>
      %c0_i32_58 = arith.constant 0 : i32
      %213 = vector.broadcast %c0_i32_58 : i32 to vector<16x1xi32>
      %214 = arith.cmpi eq, %211, %213 : vector<16x1xi32>
      %cst_59 = arith.constant 5.000000e-02 : f32
      %215 = vector.broadcast %cst_59 : f32 to vector<16x1xf32>
      %216 = arith.select %214, %215, %212 : vector<16x1xi1>, vector<16x1xf32>
      %c8_i32_60 = arith.constant 8 : i32
      %217 = vector.broadcast %c8_i32_60 : i32 to vector<16x1xi32>
      %218 = arith.cmpi eq, %211, %217 : vector<16x1xi32>
      %cst_61 = arith.constant 7.000000e-02 : f32
      %219 = vector.broadcast %cst_61 : f32 to vector<16x1xf32>
      %220 = arith.select %218, %219, %216 : vector<16x1xi1>, vector<16x1xf32>
      %c1_i32 = arith.constant 1 : i32
      %221 = vector.broadcast %c1_i32 : i32 to vector<16x1xi32>
      %222 = arith.cmpi eq, %211, %221 : vector<16x1xi32>
      %cst_62 = arith.constant 1.200000e-01 : f32
      %223 = vector.broadcast %cst_62 : f32 to vector<16x1xf32>
      %224 = arith.select %222, %223, %220 : vector<16x1xi1>, vector<16x1xf32>
      %c9_i32 = arith.constant 9 : i32
      %225 = vector.broadcast %c9_i32 : i32 to vector<16x1xi32>
      %226 = arith.cmpi eq, %211, %225 : vector<16x1xi32>
      %cst_63 = arith.constant 1.500000e-01 : f32
      %227 = vector.broadcast %cst_63 : f32 to vector<16x1xf32>
      %228 = arith.select %226, %227, %224 : vector<16x1xi1>, vector<16x1xf32>
      %c2_i32_64 = arith.constant 2 : i32
      %229 = vector.broadcast %c2_i32_64 : i32 to vector<16x1xi32>
      %230 = arith.cmpi eq, %211, %229 : vector<16x1xi32>
      %cst_65 = arith.constant 2.200000e-01 : f32
      %231 = vector.broadcast %cst_65 : f32 to vector<16x1xf32>
      %232 = arith.select %230, %231, %228 : vector<16x1xi1>, vector<16x1xf32>
      %c10_i32 = arith.constant 10 : i32
      %233 = vector.broadcast %c10_i32 : i32 to vector<16x1xi32>
      %234 = arith.cmpi eq, %211, %233 : vector<16x1xi32>
      %cst_66 = arith.constant 3.000000e-01 : f32
      %235 = vector.broadcast %cst_66 : f32 to vector<16x1xf32>
      %236 = arith.select %234, %235, %232 : vector<16x1xi1>, vector<16x1xf32>
      %c3_i32_67 = arith.constant 3 : i32
      %237 = vector.broadcast %c3_i32_67 : i32 to vector<16x1xi32>
      %238 = arith.cmpi eq, %211, %237 : vector<16x1xi32>
      %cst_68 = arith.constant 3.500000e-01 : f32
      %239 = vector.broadcast %cst_68 : f32 to vector<16x1xf32>
      %240 = arith.select %238, %239, %236 : vector<16x1xi1>, vector<16x1xf32>
      %c11_i32 = arith.constant 11 : i32
      %241 = vector.broadcast %c11_i32 : i32 to vector<16x1xi32>
      %242 = arith.cmpi eq, %211, %241 : vector<16x1xi32>
      %cst_69 = arith.constant 2.000000e-01 : f32
      %243 = vector.broadcast %cst_69 : f32 to vector<16x1xf32>
      %244 = arith.select %242, %243, %240 : vector<16x1xi1>, vector<16x1xf32>
      %c4_i32 = arith.constant 4 : i32
      %245 = vector.broadcast %c4_i32 : i32 to vector<16x1xi32>
      %246 = arith.cmpi eq, %211, %245 : vector<16x1xi32>
      %cst_70 = arith.constant 6.000000e-01 : f32
      %247 = vector.broadcast %cst_70 : f32 to vector<16x1xf32>
      %248 = arith.select %246, %247, %244 : vector<16x1xi1>, vector<16x1xf32>
      %c12_i32 = arith.constant 12 : i32
      %249 = vector.broadcast %c12_i32 : i32 to vector<16x1xi32>
      %250 = arith.cmpi eq, %211, %249 : vector<16x1xi32>
      %cst_71 = arith.constant 4.500000e-01 : f32
      %251 = vector.broadcast %cst_71 : f32 to vector<16x1xf32>
      %252 = arith.select %250, %251, %248 : vector<16x1xi1>, vector<16x1xf32>
      %c0_72 = arith.constant 0 : index
      %c0_73 = arith.constant 0 : index
      %253 = vector.load %arg5[%c0_72, %c0_73] : memref<16x1xf32, #tpu.memory_space<vmem>>, vector<16x1xf32>
      tpu.vector_store %arg5[%c0_72, %c0_73], %252 {strides = array<i32>} : memref<16x1xf32, #tpu.memory_space<vmem>>, vector<16x1xf32>,
    } else {
    }
    %c0 = arith.constant 0 : index
    %c0_1 = arith.constant 0 : index
    %3 = vector.load %arg2[%c0, %c0_1] : memref<48x128xf32, #tpu.memory_space<vmem>>, vector<48x128xf32>
    %c0_2 = arith.constant 0 : index
    %c0_3 = arith.constant 0 : index
    %4 = vector.load %arg3[%c0_2, %c0_3] : memref<48x128xf32, #tpu.memory_space<vmem>>, vector<48x128xf32>
    %5 = vector.extract_strided_slice %3 {offsets = [0, 0], sizes = [24, 128], strides = [1, 1]} : vector<48x128xf32> to vector<24x128xf32>
    %6 = arith.negf %5 : vector<24x128xf32>
    %7 = math.exp %6 : vector<24x128xf32>
    %cst = arith.constant 1.000000e+00 : f32
    %8 = vector.broadcast %cst : f32 to vector<24x128xf32>
    %9 = arith.addf %8, %7 : vector<24x128xf32>
    %10 = arith.divf %8, %9 : vector<24x128xf32>
    %11 = vector.extract_strided_slice %10 {offsets = [0, 0], sizes = [8, 128], strides = [1, 1]} : vector<24x128xf32> to vector<8x128xf32>
    %12 = vector.extract_strided_slice %10 {offsets = [8, 0], sizes = [8, 128], strides = [1, 1]} : vector<24x128xf32> to vector<8x128xf32>
    %13 = vector.extract_strided_slice %10 {offsets = [16, 0], sizes = [8, 128], strides = [1, 1]} : vector<24x128xf32> to vector<8x128xf32>
    %14 = vector.extract_strided_slice %3 {offsets = [24, 0], sizes = [16, 128], strides = [1, 1]} : vector<48x128xf32> to vector<16x128xf32>
    %15 = math.tanh %14 : vector<16x128xf32>
    %16 = math.exp %15 : vector<16x128xf32>
    %c0_4 = arith.constant 0 : index
    %c0_5 = arith.constant 0 : index
    %17 = vector.load %arg5[%c0_4, %c0_5] : memref<16x1xf32, #tpu.memory_space<vmem>>, vector<16x1xf32>
    %18 = vector.broadcast %17 : vector<16x1xf32> to vector<16x128xf32>
    %19 = arith.mulf %16, %18 : vector<16x128xf32>
    %20 = vector.extract_strided_slice %19 {offsets = [0, 0], sizes = [8, 128], strides = [1, 1]} : vector<16x128xf32> to vector<8x128xf32>
    %21 = vector.extract_strided_slice %19 {offsets = [8, 0], sizes = [8, 128], strides = [1, 1]} : vector<16x128xf32> to vector<8x128xf32>
    %22 = vector.extract_strided_slice %4 {offsets = [0, 0], sizes = [8, 128], strides = [1, 1]} : vector<48x128xf32> to vector<8x128xf32>
    %23 = vector.extract_strided_slice %4 {offsets = [8, 0], sizes = [8, 128], strides = [1, 1]} : vector<48x128xf32> to vector<8x128xf32>
    %24 = vector.extract_strided_slice %4 {offsets = [16, 0], sizes = [8, 128], strides = [1, 1]} : vector<48x128xf32> to vector<8x128xf32>
    %25 = vector.extract_strided_slice %4 {offsets = [24, 0], sizes = [8, 128], strides = [1, 1]} : vector<48x128xf32> to vector<8x128xf32>
    %26 = vector.extract_strided_slice %4 {offsets = [32, 0], sizes = [8, 128], strides = [1, 1]} : vector<48x128xf32> to vector<8x128xf32>
    %27 = vector.extract_strided_slice %3 {offsets = [40, 0], sizes = [8, 128], strides = [1, 1]} : vector<48x128xf32> to vector<8x128xf32>
    %28 = vector.extract_strided_slice %4 {offsets = [40, 0], sizes = [8, 128], strides = [1, 1]} : vector<48x128xf32> to vector<8x128xf32>
    %29 = tpu.iota {dimensions = array<i32: 1>} : vector<1x128xi32>
    %c2_i32 = arith.constant 2 : i32
    %30 = arith.muli %arg0, %c2_i32 : i32
    %31 = arith.addi %30, %arg1 : i32
    %c128_i32 = arith.constant 128 : i32
    %32 = arith.muli %31, %c128_i32 : i32
    %33 = vector.broadcast %32 : i32 to vector<1x128xi32>
    %34 = arith.addi %29, %33 : vector<1x128xi32>
    %c338_i32 = arith.constant 338 : i32
    %35 = vector.broadcast %c338_i32 : i32 to vector<1x128xi32>
    %36 = arith.cmpi slt, %34, %35 : vector<1x128xi32>
    %37 = tpu.iota {dimensions = array<i32: 0>} : vector<8x1xi32>
    %c5_i32 = arith.constant 5 : i32
    %38 = vector.broadcast %c5_i32 : i32 to vector<8x1xi32>
    %39 = arith.cmpi slt, %37, %38 : vector<8x1xi32>
    %40 = tpu.iota {dimensions = array<i32: 0>} : vector<8x1xi32>
    %c3_i32 = arith.constant 3 : i32
    %41 = vector.broadcast %c3_i32 : i32 to vector<8x1xi32>
    %42 = arith.cmpi slt, %40, %41 : vector<8x1xi32>
    %cst_6 = arith.constant dense<0.000000e+00> : vector<128xf32>
    %43 = vector.multi_reduction <add>, %24, %cst_6 [0] : vector<8x128xf32> to vector<128xf32>
    %44 = vector.shape_cast %43 : vector<128xf32> to vector<1x128xf32>
    %cst_7 = arith.constant 0.000000e+00 : f32
    %45 = vector.broadcast %cst_7 : f32 to vector<1x128xf32>
    %46 = arith.cmpf ogt, %44, %45 : vector<1x128xf32>
    %47 = arith.andi %46, %36 : vector<1x128xi1>
    %cst_8 = arith.constant 0.000000e+00 : f32
    %48 = vector.broadcast %cst_8 : f32 to vector<1x128xf32>
    %49 = arith.cmpf oeq, %44, %48 : vector<1x128xf32>
    %50 = arith.andi %49, %36 : vector<1x128xi1>
    %51 = vector.broadcast %50 : vector<1x128xi1> to vector<8x128xi1>
    %52 = vector.broadcast %39 : vector<8x1xi1> to vector<8x128xi1>
    %53 = arith.andi %51, %52 : vector<8x128xi1>
    %54 = arith.subf %13, %24 : vector<8x128xf32>
    %55 = arith.mulf %54, %54 : vector<8x128xf32>
    %cst_9 = arith.constant 0.000000e+00 : f32
    %56 = vector.broadcast %cst_9 : f32 to vector<8x128xf32>
    %57 = arith.select %53, %55, %56 : vector<8x128xi1>, vector<8x128xf32>
    %cst_10 = arith.constant -1.000000e+30 : f32
    %58 = vector.shape_cast %42 : vector<8x1xi1> to vector<8x1xi1>
    %59 = vector.broadcast %58 : vector<8x1xi1> to vector<8x128xi1>
    %60 = vector.broadcast %cst_10 : f32 to vector<8x128xf32>
    %61 = arith.select %59, %27, %60 : vector<8x128xi1>, vector<8x128xf32>
    %cst_11 = arith.constant dense<0xFF800000> : vector<128xf32>
    %62 = vector.multi_reduction <maximumf>, %61, %cst_11 [0] : vector<8x128xf32> to vector<128xf32>
    %63 = vector.shape_cast %62 : vector<128xf32> to vector<1x128xf32>
    %64 = vector.broadcast %63 : vector<1x128xf32> to vector<8x128xf32>
    %65 = arith.subf %27, %64 : vector<8x128xf32>
    %66 = math.exp %65 : vector<8x128xf32>
    %cst_12 = arith.constant 0.000000e+00 : f32
    %67 = vector.shape_cast %42 : vector<8x1xi1> to vector<8x1xi1>
    %68 = vector.broadcast %67 : vector<8x1xi1> to vector<8x128xi1>
    %69 = vector.broadcast %cst_12 : f32 to vector<8x128xf32>
    %70 = arith.select %68, %66, %69 : vector<8x128xi1>, vector<8x128xf32>
    %cst_13 = arith.constant dense<0.000000e+00> : vector<128xf32>
    %71 = vector.multi_reduction <add>, %70, %cst_13 [0] : vector<8x128xf32> to vector<128xf32>
    %72 = vector.shape_cast %71 : vector<128xf32> to vector<1x128xf32>
    %73 = tpu.reciprocal %72 {approx = true} : vector<1x128xf32> -> vector<1x128xf32>
    %74 = vector.broadcast %73 : vector<1x128xf32> to vector<8x128xf32>
    %75 = arith.mulf %70, %74 : vector<8x128xf32>
    %76 = vector.broadcast %47 : vector<1x128xi1> to vector<8x128xi1>
    %77 = vector.broadcast %42 : vector<8x1xi1> to vector<8x128xi1>
    %78 = arith.andi %76, %77 : vector<8x128xi1>
    %79 = arith.subf %75, %28 : vector<8x128xf32>
    %80 = arith.mulf %79, %79 : vector<8x128xf32>
    %cst_14 = arith.constant 0.000000e+00 : f32
    %81 = vector.broadcast %cst_14 : f32 to vector<8x128xf32>
    %82 = arith.select %78, %80, %81 : vector<8x128xi1>, vector<8x128xf32>
    %83 = tpu.iota {dimensions = array<i32: 0>} : vector<8x128xi32>
    %cst_15 = arith.constant dense<0xFF800000> : vector<128xf32>
    %84 = vector.multi_reduction <maximumf>, %24, %cst_15 [0] : vector<8x128xf32> to vector<128xf32>
    %85 = vector.shape_cast %84 : vector<128xf32> to vector<1x128xf32>
    %86 = vector.broadcast %85 : vector<1x128xf32> to vector<8x128xf32>
    %87 = arith.cmpf oeq, %24, %86 : vector<8x128xf32>
    %c8_i32 = arith.constant 8 : i32
    %88 = vector.broadcast %c8_i32 : i32 to vector<8x128xi32>
    %89 = arith.select %87, %83, %88 : vector<8x128xi1>, vector<8x128xi32>
    %cst_16 = arith.constant dense<2147483647> : vector<128xi32>
    %90 = vector.multi_reduction <minsi>, %89, %cst_16 [0] : vector<8x128xi32> to vector<128xi32>
    %91 = vector.shape_cast %90 : vector<128xi32> to vector<1x128xi32>
    %92 = vector.broadcast %91 : vector<1x128xi32> to vector<8x128xi32>
    %93 = arith.cmpi eq, %83, %92 : vector<8x128xi32>
    %cst_17 = arith.constant 1.000000e+00 : f32
    %94 = vector.broadcast %cst_17 : f32 to vector<8x128xf32>
    %95 = arith.cmpf oeq, %24, %94 : vector<8x128xf32>
    %96 = arith.andi %93, %95 : vector<8x128xi1>
    %97 = vector.broadcast %47 : vector<1x128xi1> to vector<8x128xi1>
    %98 = arith.andi %96, %97 : vector<8x128xi1>
    %cst_18 = arith.constant 3.200000e+01 : f32
    %99 = vector.broadcast %cst_18 : f32 to vector<8x128xf32>
    %100 = arith.mulf %11, %99 : vector<8x128xf32>
    %cst_19 = arith.constant 2.240000e+02 : f32
    %101 = vector.broadcast %cst_19 : f32 to vector<8x128xf32>
    %102 = arith.mulf %20, %101 : vector<8x128xf32>
    %103 = arith.subf %100, %102 : vector<8x128xf32>
    %cst_20 = arith.constant 3.200000e+01 : f32
    %104 = vector.broadcast %cst_20 : f32 to vector<8x128xf32>
    %105 = arith.mulf %12, %104 : vector<8x128xf32>
    %cst_21 = arith.constant 2.240000e+02 : f32
    %106 = vector.broadcast %cst_21 : f32 to vector<8x128xf32>
    %107 = arith.mulf %21, %106 : vector<8x128xf32>
    %108 = arith.subf %105, %107 : vector<8x128xf32>
    %cst_22 = arith.constant 3.200000e+01 : f32
    %109 = vector.broadcast %cst_22 : f32 to vector<8x128xf32>
    %110 = arith.mulf %11, %109 : vector<8x128xf32>
    %cst_23 = arith.constant 2.240000e+02 : f32
    %111 = vector.broadcast %cst_23 : f32 to vector<8x128xf32>
    %112 = arith.mulf %20, %111 : vector<8x128xf32>
    %113 = arith.addf %110, %112 : vector<8x128xf32>
    %cst_24 = arith.constant 3.200000e+01 : f32
    %114 = vector.broadcast %cst_24 : f32 to vector<8x128xf32>
    %115 = arith.mulf %12, %114 : vector<8x128xf32>
    %cst_25 = arith.constant 2.240000e+02 : f32
    %116 = vector.broadcast %cst_25 : f32 to vector<8x128xf32>
    %117 = arith.mulf %21, %116 : vector<8x128xf32>
    %118 = arith.addf %115, %117 : vector<8x128xf32>
    %cst_26 = arith.constant 3.200000e+01 : f32
    %119 = vector.broadcast %cst_26 : f32 to vector<8x128xf32>
    %120 = arith.mulf %22, %119 : vector<8x128xf32>
    %cst_27 = arith.constant 2.240000e+02 : f32
    %121 = vector.broadcast %cst_27 : f32 to vector<8x128xf32>
    %122 = arith.mulf %25, %121 : vector<8x128xf32>
    %123 = arith.subf %120, %122 : vector<8x128xf32>
    %cst_28 = arith.constant 3.200000e+01 : f32
    %124 = vector.broadcast %cst_28 : f32 to vector<8x128xf32>
    %125 = arith.mulf %23, %124 : vector<8x128xf32>
    %cst_29 = arith.constant 2.240000e+02 : f32
    %126 = vector.broadcast %cst_29 : f32 to vector<8x128xf32>
    %127 = arith.mulf %26, %126 : vector<8x128xf32>
    %128 = arith.subf %125, %127 : vector<8x128xf32>
    %cst_30 = arith.constant 3.200000e+01 : f32
    %129 = vector.broadcast %cst_30 : f32 to vector<8x128xf32>
    %130 = arith.mulf %22, %129 : vector<8x128xf32>
    %cst_31 = arith.constant 2.240000e+02 : f32
    %131 = vector.broadcast %cst_31 : f32 to vector<8x128xf32>
    %132 = arith.mulf %25, %131 : vector<8x128xf32>
    %133 = arith.addf %130, %132 : vector<8x128xf32>
    %cst_32 = arith.constant 3.200000e+01 : f32
    %134 = vector.broadcast %cst_32 : f32 to vector<8x128xf32>
    %135 = arith.mulf %23, %134 : vector<8x128xf32>
    %cst_33 = arith.constant 2.240000e+02 : f32
    %136 = vector.broadcast %cst_33 : f32 to vector<8x128xf32>
    %137 = arith.mulf %26, %136 : vector<8x128xf32>
    %138 = arith.addf %135, %137 : vector<8x128xf32>
    %139 = arith.subf %113, %103 : vector<8x128xf32>
    %140 = arith.subf %118, %108 : vector<8x128xf32>
    %141 = arith.mulf %139, %140 : vector<8x128xf32>
    %142 = arith.subf %133, %123 : vector<8x128xf32>
    %143 = arith.subf %138, %128 : vector<8x128xf32>
    %144 = arith.mulf %142, %143 : vector<8x128xf32>
    %145 = arith.minimumf %113, %133 : vector<8x128xf32>
    %146 = arith.maximumf %103, %123 : vector<8x128xf32>
    %147 = arith.subf %145, %146 : vector<8x128xf32>
    %148 = arith.minimumf %118, %138 : vector<8x128xf32>
    %149 = arith.maximumf %108, %128 : vector<8x128xf32>
    %150 = arith.subf %148, %149 : vector<8x128xf32>
    %151 = arith.mulf %147, %150 : vector<8x128xf32>
    %152 = arith.addf %141, %144 : vector<8x128xf32>
    %153 = arith.subf %152, %151 : vector<8x128xf32>
    %cst_34 = arith.constant 9.99999997E-7 : f32
    %154 = vector.broadcast %cst_34 : f32 to vector<8x128xf32>
    %155 = arith.addf %153, %154 : vector<8x128xf32>
    %156 = tpu.reciprocal %155 {approx = true} : vector<8x128xf32> -> vector<8x128xf32>
    %157 = arith.mulf %151, %156 : vector<8x128xf32>
    %158 = arith.subf %103, %133 : vector<8x128xf32>
    %cst_35 = arith.constant 0.000000e+00 : f32
    %159 = vector.broadcast %cst_35 : f32 to vector<8x128xf32>
    %160 = arith.cmpf oge, %158, %159 : vector<8x128xf32>
    %161 = arith.subf %123, %113 : vector<8x128xf32>
    %cst_36 = arith.constant 0.000000e+00 : f32
    %162 = vector.broadcast %cst_36 : f32 to vector<8x128xf32>
    %163 = arith.cmpf oge, %161, %162 : vector<8x128xf32>
    %164 = arith.ori %160, %163 : vector<8x128xi1>
    %165 = arith.subf %128, %118 : vector<8x128xf32>
    %cst_37 = arith.constant 0.000000e+00 : f32
    %166 = vector.broadcast %cst_37 : f32 to vector<8x128xf32>
    %167 = arith.cmpf oge, %165, %166 : vector<8x128xf32>
    %168 = arith.ori %164, %167 : vector<8x128xi1>
    %169 = arith.subf %108, %138 : vector<8x128xf32>
    %cst_38 = arith.constant 0.000000e+00 : f32
    %170 = vector.broadcast %cst_38 : f32 to vector<8x128xf32>
    %171 = arith.cmpf oge, %169, %170 : vector<8x128xf32>
    %172 = arith.ori %168, %171 : vector<8x128xi1>
    %cst_39 = arith.constant 0.000000e+00 : f32
    %173 = vector.broadcast %cst_39 : f32 to vector<8x128xf32>
    %174 = arith.select %172, %173, %157 : vector<8x128xi1>, vector<8x128xf32>
    %175 = arith.subf %11, %22 : vector<8x128xf32>
    %176 = arith.mulf %175, %175 : vector<8x128xf32>
    %177 = arith.subf %12, %23 : vector<8x128xf32>
    %178 = arith.mulf %177, %177 : vector<8x128xf32>
    %179 = arith.addf %176, %178 : vector<8x128xf32>
    %180 = arith.subf %20, %25 : vector<8x128xf32>
    %181 = arith.mulf %180, %180 : vector<8x128xf32>
    %182 = arith.addf %179, %181 : vector<8x128xf32>
    %183 = arith.subf %21, %26 : vector<8x128xf32>
    %184 = arith.mulf %183, %183 : vector<8x128xf32>
    %185 = arith.addf %182, %184 : vector<8x128xf32>
    %cst_40 = arith.constant 0.000000e+00 : f32
    %186 = vector.broadcast %cst_40 : f32 to vector<8x128xf32>
    %187 = arith.select %98, %185, %186 : vector<8x128xi1>, vector<8x128xf32>
    %188 = arith.subf %13, %174 : vector<8x128xf32>
    %189 = arith.mulf %188, %188 : vector<8x128xf32>
    %cst_41 = arith.constant 0.000000e+00 : f32
    %190 = vector.broadcast %cst_41 : f32 to vector<8x128xf32>
    %191 = arith.select %98, %189, %190 : vector<8x128xi1>, vector<8x128xf32>
    %cst_42 = arith.constant 5.000000e+00 : f32
    %192 = vector.broadcast %cst_42 : f32 to vector<8x128xf32>
    %193 = arith.mulf %192, %187 : vector<8x128xf32>
    %cst_43 = arith.constant 5.000000e+00 : f32
    %194 = vector.broadcast %cst_43 : f32 to vector<8x128xf32>
    %195 = arith.mulf %194, %191 : vector<8x128xf32>
    %196 = arith.addf %193, %195 : vector<8x128xf32>
    %cst_44 = arith.constant 5.000000e-01 : f32
    %197 = vector.broadcast %cst_44 : f32 to vector<8x128xf32>
    %198 = arith.mulf %197, %57 : vector<8x128xf32>
    %199 = arith.addf %196, %198 : vector<8x128xf32>
    %cst_45 = arith.constant 1.000000e+00 : f32
    %200 = vector.broadcast %cst_45 : f32 to vector<8x128xf32>
    %201 = arith.mulf %200, %82 : vector<8x128xf32>
    %202 = tpu.concatenate %199, %201 in 0 : vector<8x128xf32>, vector<8x128xf32> -> vector<16x128xf32>
    %cst_46 = arith.constant dense<0.000000e+00> : vector<128xf32>
    %203 = vector.multi_reduction <add>, %202, %cst_46 [0] : vector<16x128xf32> to vector<128xf32>
    %204 = vector.shape_cast %203 : vector<128xf32> to vector<1x128xf32>
    %c0_47 = arith.constant 0 : index
    %c0_48 = arith.constant 0 : index
    %c0_49 = arith.constant 0 : index
    %205 = vector.load %arg4[%c0_47, %c0_48, %c0_49] : memref<1x1x128xf32, #tpu.memory_space<vmem>>, vector<1x1x128xf32>
    %206 = vector.shape_cast %204 : vector<1x128xf32> to vector<1x1x128xf32>
    %207 = arith.addf %205, %206 : vector<1x1x128xf32>
    %c0_50 = arith.constant 0 : index
    %c0_51 = arith.constant 0 : index
    %c0_52 = arith.constant 0 : index
    %208 = vector.load %arg4[%c0_50, %c0_51, %c0_52] : memref<1x1x128xf32, #tpu.memory_space<vmem>>, vector<1x1x128xf32>
    tpu.vector_store %arg4[%c0_50, %c0_51, %c0_52], %207 {strides = array<i32>} : memref<1x1x128xf32, #tpu.memory_space<vmem>>, vector<1x1x128xf32>,
    return
  }
  func.func @transform_0(%arg0: i32, %arg1: i32) -> (i32, i32) {
    %c2_i32 = arith.constant 2 : i32
    %0 = arith.muli %arg0, %c2_i32 : i32
    %1 = arith.addi %0, %arg1 : i32
    %c0_i32 = arith.constant 0 : i32
    %c0_i32_0 = arith.constant 0 : i32
    return %c0_i32, %1 : i32, i32
  }
  func.func @transform_1(%arg0: i32, %arg1: i32) -> (i32, i32) {
    %c2_i32 = arith.constant 2 : i32
    %0 = arith.muli %arg0, %c2_i32 : i32
    %1 = arith.addi %0, %arg1 : i32
    %c0_i32 = arith.constant 0 : i32
    %c0_i32_0 = arith.constant 0 : i32
    return %c0_i32, %1 : i32, i32
  }
  func.func @transform_2(%arg0: i32, %arg1: i32) -> (i32, i32, i32) {
    %c0_i32 = arith.constant 0 : i32
    %c0_i32_0 = arith.constant 0 : i32
    %c0_i32_1 = arith.constant 0 : i32
    return %arg0, %c0_i32, %c0_i32_0 : i32, i32, i32
  }
}

</mosaic_0001>

<llo_original>
// kernel: forward.1
$region0: #{forward.1}
  #allocation0 [shape = 'u32[]', space=smem, size = 0x4, offset = 0x4, fixed_abs, tag = 'smem constant byte address 0x4 - core index']
  #allocation1 [shape = 'u32[144,128]{1,0:T(1,128)}', space=vmem, size = 0x12000, scoped, tag = 'internal scratch']
  #allocation2 [shape = 'f32[16,1]{1,0:T(8,128)}', space=vmem, size = 0x2000, scoped, tag = 'scratch operand']
  %s0 = inlined_call_operand.vmem [shape: f32[48,512], index: 0, kind: input, shape index: {}]
  %s1 = inlined_call_operand.vmem [shape: f32[48,512], index: 1, kind: input, shape index: {}]
  %s2 = inlined_call_operand.vmem [shape: f32[2,1,128], index: 2, kind: output, shape index: {}]
  %s3 = sld [smem:[#allocation0]]
  $region121: #{forward.1} parent=0
    _
  %s5 = ssub.s32 1, %s3
  %s6 = scalar_select 0, %s5, %s3
  $region1: #{forward.1} parent=0
    #allocation3 [shape = 'u8[49152]{0}', space=vmem, size = 0xc000, scoped, tag = 'input window, operand 0']
    #allocation4 [shape = 'u8[49152]{0}', space=vmem, size = 0xc000, scoped, tag = 'input window, operand 1']
    loop: start=0, step=1, limit=6
    $region2: #{forward.1} parent=1 // loop_pre_header
      _
    $region3: #{forward.1} parent=1 // loop_header
      %s8 = sphi 0, %s12
      %p9 = scmp.ge.s32.totalorder %s8, 6
      %s15 = sphi 0, %s27
      %s16 = sphi 0, %s23
      %s17 = sphi 0, %s15
      %s18 = sphi 0, %s16
      %s19 = sphi 0, %s17
      %s20 = sphi 0, %s18
      %s34 = sphi 0, %s36
      %s37 = sphi 0, %s34
      %s38 = sphi 0, %s37
      %s54 = sphi 0, %s38
      %s64 = sphi 0, %s66
      %s67 = sphi 0, %s64
      %s68 = sphi 0, %s67
      %s84 = sphi 0, %s68
      %s90 = sphi 0, %s92
      %s93 = sphi 0, %s90
      %s94 = sphi 0, %s93
      %s110 = sphi 0, %s94
    $region4: #{forward.1} parent=1 // loop_header_branch
      %11 = sbr.rel (%p9) target = $region8
    $region5: #{forward.1} parent=1 // loop_body
      %s13 = ssub.s32 %s8, 1
      %s14 = ssub.s32 %s8, 2
      %s21 = sadd.s32 1, %s16
      %p22 = scmp.ge.s32.totalorder %s21, 2
      %s23 = scalar_select %p22, 0, %s21
      %s24 = sadd.s32 1, %s15
      %s25 = scalar_select %p22, %s24, %s15
      %p26 = scmp.ge.s32.totalorder %s25, 2
      %s27 = scalar_select %p26, 0, %s25
      %s28 = smul.u32 %s15, 2
      %s29 = sadd.s32 %s28, %s16
      %s30 = smul.u32 %s27, 2
      %s31 = sadd.s32 %s30, %s23
      %s32 = ssub.s32 %s29, %s31
      %p33 = scmp.eq.s32.totalorder %s32, 0
      %s35 = sadd.s32 %s34, 1
      %s36 = scalar_select %p33, %s34, %s35
      %p39 = pneg %p33
      %p40 = scmp.eq.s32.totalorder %s8, 3
      %p41 = por %p39, %p40
      %p42 = scmp.ne.s32.totalorder %s34, %s37
      %p43 = scmp.eq.s32.totalorder %s8, 0
      %p44 = por %p42, %p43
      %p45 = scmp.ne.s32.totalorder %s34, %s37
      %p46 = scmp.eq.s32.totalorder %s13, 3
      %p47 = por %p45, %p46
      %p48 = scmp.ne.s32.totalorder %s37, %s38
      %p49 = scmp.eq.s32.totalorder %s13, 0
      %p50 = por %p48, %p49
      %p51 = scmp.ne.s32.totalorder %s37, %s38
      %p52 = scmp.eq.s32.totalorder %s14, 3
      %p53 = por %p51, %p52
      %p55 = scmp.ne.s32.totalorder %s38, %s54
      %p56 = scmp.eq.s32.totalorder %s14, 0
      %p57 = por %p55, %p56
      %s58 = smul.u32 %s15, 2
      %s59 = sadd.s32 %s58, %s16
      %s60 = smul.u32 %s27, 2
      %s61 = sadd.s32 %s60, %s23
      %s62 = ssub.s32 %s59, %s61
      %p63 = scmp.eq.s32.totalorder %s62, 0
      %s65 = sadd.s32 %s64, 1
      %s66 = scalar_select %p63, %s64, %s65
      %p69 = pneg %p63
      %p70 = scmp.eq.s32.totalorder %s8, 3
      %p71 = por %p69, %p70
      %p72 = scmp.ne.s32.totalorder %s64, %s67
      %p73 = scmp.eq.s32.totalorder %s8, 0
      %p74 = por %p72, %p73
      %p75 = scmp.ne.s32.totalorder %s64, %s67
      %p76 = scmp.eq.s32.totalorder %s13, 3
      %p77 = por %p75, %p76
      %p78 = scmp.ne.s32.totalorder %s67, %s68
      %p79 = scmp.eq.s32.totalorder %s13, 0
      %p80 = por %p78, %p79
      %p81 = scmp.ne.s32.totalorder %s67, %s68
      %p82 = scmp.eq.s32.totalorder %s14, 3
      %p83 = por %p81, %p82
      %p85 = scmp.ne.s32.totalorder %s68, %s84
      %p86 = scmp.eq.s32.totalorder %s14, 0
      %p87 = por %p85, %p86
      %s88 = ssub.s32 %s15, %s27
      %p89 = scmp.eq.s32.totalorder %s88, 0
      %s91 = sadd.s32 %s90, 1
      %s92 = scalar_select %p89, %s90, %s91
      %p95 = pneg %p89
      %p96 = scmp.eq.s32.totalorder %s8, 3
      %p97 = por %p95, %p96
      %p98 = scmp.ne.s32.totalorder %s90, %s93
      %p99 = scmp.eq.s32.totalorder %s8, 0
      %p100 = por %p98, %p99
      %p101 = scmp.ne.s32.totalorder %s90, %s93
      %p102 = scmp.eq.s32.totalorder %s13, 3
      %p103 = por %p101, %p102
      %p104 = scmp.ne.s32.totalorder %s93, %s94
      %p105 = scmp.eq.s32.totalorder %s13, 0
      %p106 = por %p104, %p105
      %p107 = scmp.ne.s32.totalorder %s93, %s94
      %p108 = scmp.eq.s32.totalorder %s14, 3
      %p109 = por %p107, %p108
      %p111 = scmp.ne.s32.totalorder %s94, %s110
      %p112 = scmp.eq.s32.totalorder %s14, 0
      %p113 = por %p111, %p112
      %p114 = scmp.le.s32.totalorder 1, %s8
      %p115 = scmp.lt.s32.totalorder %s8, 5
      %p116 = pnand %p114, %p115
      %p117 = pneg %p116
      // Predicated region
      $region9: #{forward.1} parent=5 // pred_check
        _
      $region10: #{forward.1} parent=5 // pred_check_branch
        %119 = sbr.rel (%p116) target = $region12
      $region11: #{forward.1} parent=5 // pred_region
        %s120 = ssub.s32 %s8, 1
      $region12: #{forward.1} parent=5 // pred_fallthru
        _
      %p121 = scmp.lt.s32.totalorder %s8, 4
      // Predicated region
      $region13: #{forward.1} parent=5 // pred_check
        %p122 = pneg %p121
      $region14: #{forward.1} parent=5 // pred_check_branch
        %124 = sbr.rel (%p122) target = $region16
      $region15: #{forward.1} parent=5 // pred_region
        // Predicated region
        $region17: #{forward.1} parent=15 // pred_check
          %p125 = pneg %p44
        $region18: #{forward.1} parent=15 // pred_check_branch
          %127 = sbr.rel (%p125) target = $region20
        $region19: #{forward.1} parent=15 // pred_region
          %s128 = sand.u32 %s34, 1
          %s129 = sand.u32 %s34, 1
          %s130 = smul.addr %s129, 48
          %s131 = scalar_lea.vmem [#allocation3], %s130
          %s132 = smul.u32 %s15, 2
          %s133 = sadd.s32 %s132, %s16
          %s134 = smul.addr %s133, 8
          %s135 = scalar_lea.vmem %s0, %s134
          // Predicated region
          $region21: #{forward.1} parent=19 // pred_check
            _
          $region22: #{forward.1} parent=19 // pred_check_branch
            %137 = sbr.rel (0) target = $region24
          $region23: #{forward.1} parent=19 // pred_region
            // Predicated region
            $region25: #{forward.1} parent=23 // pred_check
              _
            $region26: #{forward.1} parent=23 // pred_check_branch
              %139 = sbr.rel (0) target = $region28
            $region27: #{forward.1} parent=23 // pred_region
              // Predicated region
              $region40: #{forward.1} parent=27 // pred_check
                _
              $region41: #{forward.1} parent=27 // pred_check_branch
                %164 = sbr.rel (0) target = $region43
              $region42: #{forward.1} parent=27 // pred_region
                loop: start=0, step=1, limit=1
                $region44: #{forward.1} parent=42 // loop_pre_header
                  _
                $region45: #{forward.1} parent=42 // loop_header
                  %s166 = sphi 0, %s170
                  %p167 = scmp.ge.s32.totalorder %s166, 1
                  %s171 = sphi %s135, %s135
                  %s172 = sphi %s131, %s131
                $region46: #{forward.1} parent=42 // loop_header_branch
                  %169 = sbr.rel (%p167) target = $region50
                $region47: #{forward.1} parent=42 // loop_body
                  %v173 = vld [vmem:[%s171] sm:$0xff]
                  %174 = vst [vmem:[%s172] sm:$0xff] %v173
                  %v175 = vld [vmem:[%s171 + $0x20] sm:$0xff]
                  %176 = vst [vmem:[%s172 + $0x8] sm:$0xff] %v175
                  %v177 = vld [vmem:[%s171 + $0x40] sm:$0xff]
                  %178 = vst [vmem:[%s172 + $0x10] sm:$0xff] %v177
                  %v179 = vld [vmem:[%s171 + $0x60] sm:$0xff]
                  %180 = vst [vmem:[%s172 + $0x18] sm:$0xff] %v179
                  %v181 = vld [vmem:[%s171 + $0x80] sm:$0xff]
                  %182 = vst [vmem:[%s172 + $0x20] sm:$0xff] %v181
                  %v183 = vld [vmem:[%s171 + $0xa0] sm:$0xff]
                  %184 = vst [vmem:[%s172 + $0x28] sm:$0xff] %v183
                $region48: #{forward.1} parent=42 // loop_footer
                  %s170 = sadd.s32 1, %s166
                $region49: #{forward.1} parent=42 // loop_footer_branch
                  %165 = sbr.rel target = $region45
                $region50: #{forward.1} parent=42 // loop_exit
                  _
              $region43: #{forward.1} parent=27 // pred_fallthru
                _
              // Predicated region
              $region51: #{forward.1} parent=27 // pred_check
                _
              $region52: #{forward.1} parent=27 // pred_check_branch
                %186 = sbr.rel target = $region54
              $region53: #{forward.1} parent=27 // pred_region
                _
              $region54: #{forward.1} parent=27 // pred_fallthru
                _
            $region28: #{forward.1} parent=23 // pred_fallthru
              _
            // Predicated region
            $region29: #{forward.1} parent=23 // pred_check
              _
            $region30: #{forward.1} parent=23 // pred_check_branch
              %141 = sbr.rel target = $region32
            $region31: #{forward.1} parent=23 // pred_region
              loop: start=0, step=1, limit=1
              $region33: #{forward.1} parent=31 // loop_pre_header
                _
              $region34: #{forward.1} parent=31 // loop_header
                %s144 = sphi 0, %s148
                %p145 = scmp.ge.s32.totalorder %s144, 1
                %s149 = sphi %s135, %s135
                %s150 = sphi %s131, %s131
              $region35: #{forward.1} parent=31 // loop_header_branch
                %147 = sbr.rel (%p145) target = $region39
              $region36: #{forward.1} parent=31 // loop_body
                %v151 = vld [vmem:[%s149] sm:$0xff]
                %152 = vst [vmem:[%s150] sm:$0xff] %v151
                %v153 = vld [vmem:[%s149 + $0x20] sm:$0xff]
                %154 = vst [vmem:[%s150 + $0x8] sm:$0xff] %v153
                %v155 = vld [vmem:[%s149 + $0x40] sm:$0xff]
                %156 = vst [vmem:[%s150 + $0x10] sm:$0xff] %v155
                %v157 = vld [vmem:[%s149 + $0x60] sm:$0xff]
                %158 = vst [vmem:[%s150 + $0x18] sm:$0xff] %v157
                %v159 = vld [vmem:[%s149 + $0x80] sm:$0xff]
                %160 = vst [vmem:[%s150 + $0x20] sm:$0xff] %v159
                %v161 = vld [vmem:[%s149 + $0xa0] sm:$0xff]
                %162 = vst [vmem:[%s150 + $0x28] sm:$0xff] %v161
              $region37: #{forward.1} parent=31 // loop_footer
                %s148 = sadd.s32 1, %s144
              $region38: #{forward.1} parent=31 // loop_footer_branch
                %143 = sbr.rel target = $region34
              $region39: #{forward.1} parent=31 // loop_exit
                _
            $region32: #{forward.1} parent=23 // pred_fallthru
              _
          $region24: #{forward.1} parent=19 // pred_fallthru
            _
          %187 = vnop
        $region20: #{forward.1} parent=15 // pred_fallthru
          _
        // Predicated region
        $region55: #{forward.1} parent=15 // pred_check
          %p188 = pneg %p74
        $region56: #{forward.1} parent=15 // pred_check_branch
          %190 = sbr.rel (%p188) target = $region58
        $region57: #{forward.1} parent=15 // pred_region
          %s191 = sand.u32 %s64, 1
          %s192 = sand.u32 %s64, 1
          %s193 = smul.addr %s192, 48
          %s194 = scalar_lea.vmem [#allocation4], %s193
          %s195 = smul.u32 %s15, 2
          %s196 = sadd.s32 %s195, %s16
          %s197 = smul.addr %s196, 8
          %s198 = scalar_lea.vmem %s1, %s197
          // Predicated region
          $region59: #{forward.1} parent=57 // pred_check
            _
          $region60: #{forward.1} parent=57 // pred_check_branch
            %200 = sbr.rel (0) target = $region62
          $region61: #{forward.1} parent=57 // pred_region
            // Predicated region
            $region63: #{forward.1} parent=61 // pred_check
              _
            $region64: #{forward.1} parent=61 // pred_check_branch
              %202 = sbr.rel (0) target = $region66
            $region65: #{forward.1} parent=61 // pred_region
              // Predicated region
              $region78: #{forward.1} parent=65 // pred_check
                _
              $region79: #{forward.1} parent=65 // pred_check_branch
                %227 = sbr.rel (0) target = $region81
              $region80: #{forward.1} parent=65 // pred_region
                loop: start=0, step=1, limit=1
                $region82: #{forward.1} parent=80 // loop_pre_header
                  _
                $region83: #{forward.1} parent=80 // loop_header
                  %s229 = sphi 0, %s233
                  %p230 = scmp.ge.s32.totalorder %s229, 1
                  %s234 = sphi %s198, %s198
                  %s235 = sphi %s194, %s194
                $region84: #{forward.1} parent=80 // loop_header_branch
                  %232 = sbr.rel (%p230) target = $region88
                $region85: #{forward.1} parent=80 // loop_body
                  %v236 = vld [vmem:[%s234] sm:$0xff]
                  %237 = vst [vmem:[%s235] sm:$0xff] %v236
                  %v238 = vld [vmem:[%s234 + $0x20] sm:$0xff]
                  %239 = vst [vmem:[%s235 + $0x8] sm:$0xff] %v238
                  %v240 = vld [vmem:[%s234 + $0x40] sm:$0xff]
                  %241 = vst [vmem:[%s235 + $0x10] sm:$0xff] %v240
                  %v242 = vld [vmem:[%s234 + $0x60] sm:$0xff]
                  %243 = vst [vmem:[%s235 + $0x18] sm:$0xff] %v242
                  %v244 = vld [vmem:[%s234 + $0x80] sm:$0xff]
                  %245 = vst [vmem:[%s235 + $0x20] sm:$0xff] %v244
                  %v246 = vld [vmem:[%s234 + $0xa0] sm:$0xff]
                  %247 = vst [vmem:[%s235 + $0x28] sm:$0xff] %v246
                $region86: #{forward.1} parent=80 // loop_footer
                  %s233 = sadd.s32 1, %s229
                $region87: #{forward.1} parent=80 // loop_footer_branch
                  %228 = sbr.rel target = $region83
                $region88: #{forward.1} parent=80 // loop_exit
                  _
              $region81: #{forward.1} parent=65 // pred_fallthru
                _
              // Predicated region
              $region89: #{forward.1} parent=65 // pred_check
                _
              $region90: #{forward.1} parent=65 // pred_check_branch
                %249 = sbr.rel target = $region92
              $region91: #{forward.1} parent=65 // pred_region
                _
              $region92: #{forward.1} parent=65 // pred_fallthru
                _
            $region66: #{forward.1} parent=61 // pred_fallthru
              _
            // Predicated region
            $region67: #{forward.1} parent=61 // pred_check
              _
            $region68: #{forward.1} parent=61 // pred_check_branch
              %204 = sbr.rel target = $region70
            $region69: #{forward.1} parent=61 // pred_region
              loop: start=0, step=1, limit=1
              $region71: #{forward.1} parent=69 // loop_pre_header
                _
              $region72: #{forward.1} parent=69 // loop_header
                %s207 = sphi 0, %s211
                %p208 = scmp.ge.s32.totalorder %s207, 1
                %s212 = sphi %s198, %s198
                %s213 = sphi %s194, %s194
              $region73: #{forward.1} parent=69 // loop_header_branch
                %210 = sbr.rel (%p208) target = $region77
              $region74: #{forward.1} parent=69 // loop_body
                %v214 = vld [vmem:[%s212] sm:$0xff]
                %215 = vst [vmem:[%s213] sm:$0xff] %v214
                %v216 = vld [vmem:[%s212 + $0x20] sm:$0xff]
                %217 = vst [vmem:[%s213 + $0x8] sm:$0xff] %v216
                %v218 = vld [vmem:[%s212 + $0x40] sm:$0xff]
                %219 = vst [vmem:[%s213 + $0x10] sm:$0xff] %v218
                %v220 = vld [vmem:[%s212 + $0x60] sm:$0xff]
                %221 = vst [vmem:[%s213 + $0x18] sm:$0xff] %v220
                %v222 = vld [vmem:[%s212 + $0x80] sm:$0xff]
                %223 = vst [vmem:[%s213 + $0x20] sm:$0xff] %v222
                %v224 = vld [vmem:[%s212 + $0xa0] sm:$0xff]
                %225 = vst [vmem:[%s213 + $0x28] sm:$0xff] %v224
              $region75: #{forward.1} parent=69 // loop_footer
                %s211 = sadd.s32 1, %s207
              $region76: #{forward.1} parent=69 // loop_footer_branch
                %206 = sbr.rel target = $region72
              $region77: #{forward.1} parent=69 // loop_exit
                _
            $region70: #{forward.1} parent=61 // pred_fallthru
              _
          $region62: #{forward.1} parent=57 // pred_fallthru
            _
          %250 = vnop
        $region58: #{forward.1} parent=15 // pred_fallthru
          _
      $region16: #{forward.1} parent=5 // pred_fallthru
        _
      %p251 = scmp.le.s32.totalorder 1, %s8
      %p252 = scmp.lt.s32.totalorder %s8, 5
      %p253 = pnand %p251, %p252
      %p254 = pneg %p253
      // Predicated region
      $region93: #{forward.1} parent=5 // pred_check
        _
      $region94: #{forward.1} parent=5 // pred_check_branch
        %256 = sbr.rel (%p253) target = $region96
      $region95: #{forward.1} parent=5 // pred_region
        %s257 = ssub.s32 %s8, 1
        %s258 = sand.u32 %s37, 1
        %s259 = sand.u32 %s37, 1
        %s260 = smul.addr %s259, 48
        %s261 = scalar_lea.vmem [#allocation3], %s260
        // Predicated region
        $region97: #{forward.1} parent=95 // pred_check
          %p262 = pneg %p50
        $region98: #{forward.1} parent=95 // pred_check_branch
          %264 = sbr.rel (%p262) target = $region100
        $region99: #{forward.1} parent=95 // pred_region
          _
        $region100: #{forward.1} parent=95 // pred_fallthru
          _
        %s265 = sand.u32 %s67, 1
        %s266 = sand.u32 %s67, 1
        %s267 = smul.addr %s266, 48
        %s268 = scalar_lea.vmem [#allocation4], %s267
        // Predicated region
        $region101: #{forward.1} parent=95 // pred_check
          %p269 = pneg %p80
        $region102: #{forward.1} parent=95 // pred_check_branch
          %271 = sbr.rel (%p269) target = $region104
        $region103: #{forward.1} parent=95 // pred_region
          _
        $region104: #{forward.1} parent=95 // pred_fallthru
          _
        %s272 = sand.u32 %s37, 1
        %s273 = sand.u32 %s37, 1
        %s274 = smul.addr %s273, 48
        %s275 = scalar_lea.vmem [#allocation3], %s274
        %p276 = pneg %p50
        %p277 = pneg %p47
        %s278 = sand.u32 %s67, 1
        %s279 = sand.u32 %s67, 1
        %s280 = smul.addr %s279, 48
        %s281 = scalar_lea.vmem [#allocation4], %s280
        %p282 = pneg %p80
        %p283 = pneg %p77
        %p284 = pneg %p106
        %p285 = pneg %p103
        %p286 = scmp.lt.s32.totalorder %s17, 1
        %s287 = scalar_select %p286, %s17, 1
        %s288 = scalar_lea.vmem %s2, %s287
        %s289 = smul.u32 %s17, 2
        %s290 = sadd.s32 %s289, %s18
        %s291 = smul.u32 %s17, 2
        %s292 = sadd.s32 %s291, %s18
        %p293 = scmp.lt.s32.totalorder %s17, 1
        %s294 = scalar_select %p293, %s17, 1
        %s295 = scalar_lea.vmem %s2, %s294
        %p296 = scmp.eq.s32.totalorder %s18, 0
        // Predicated region
        $region105: #{forward.1} parent=95 // pred_check
          %p297 = pneg %p296
        $region106: #{forward.1} parent=95 // pred_check_branch
          %299 = sbr.rel (%p297) target = $region108
        $region107: #{forward.1} parent=95 // pred_region
          %300 = vst [vmem:[%s295] sm:$0x1] 0.0
          %v301 = vlaneseq
          %v302 = vshrl.u32 %v301, 7
          %v303 = vadd.s32 %v302, 8
          %vm304 = vcmp.eq.s32.totalorder %v302, 0
          %vm305 = vcmp.eq.s32.totalorder %v303, 0
          %v306 = vsel %vm304, 0.05, 0.0
          %v307 = vsel %vm305, 0.05, 0.0
          %vm308 = vcmp.eq.s32.totalorder %v302, 8
          %vm309 = vcmp.eq.s32.totalorder %v303, 8
          %v310 = vsel %vm308, 0.07, %v306
          %v311 = vsel %vm309, 0.07, %v307
          %vm312 = vcmp.eq.s32.totalorder %v302, 1
          %vm313 = vcmp.eq.s32.totalorder %v303, 1
          %v314 = vsel %vm312, 0.12, %v310
          %v315 = vsel %vm313, 0.12, %v311
          %vm316 = vcmp.eq.s32.totalorder %v302, 9
          %vm317 = vcmp.eq.s32.totalorder %v303, 9
          %v318 = vsel %vm316, 0.15, %v314
          %v319 = vsel %vm317, 0.15, %v315
          %vm320 = vcmp.eq.s32.totalorder %v302, 2
          %vm321 = vcmp.eq.s32.totalorder %v303, 2
          %v322 = vsel %vm320, 0.22, %v318
          %v323 = vsel %vm321, 0.22, %v319
          %vm324 = vcmp.eq.s32.totalorder %v302, 10
          %vm325 = vcmp.eq.s32.totalorder %v303, 10
          %v326 = vsel %vm324, 0.3, %v322
          %v327 = vsel %vm325, 0.3, %v323
          %vm328 = vcmp.eq.s32.totalorder %v302, 3
          %vm329 = vcmp.eq.s32.totalorder %v303, 3
          %v330 = vsel %vm328, 0.35, %v326
          %v331 = vsel %vm329, 0.35, %v327
          %vm332 = vcmp.eq.s32.totalorder %v302, 11
          %vm333 = vcmp.eq.s32.totalorder %v303, 11
          %v334 = vsel %vm332, 0.2, %v330
          %v335 = vsel %vm333, 0.2, %v331
          %vm336 = vcmp.eq.s32.totalorder %v302, 4
          %vm337 = vcmp.eq.s32.totalorder %v303, 4
          %v338 = vsel %vm336, 0.6, %v334
          %v339 = vsel %vm337, 0.6, %v335
          %vm340 = vcmp.eq.s32.totalorder %v302, 12
          %vm341 = vcmp.eq.s32.totalorder %v303, 12
          %v342 = vsel %vm340, 0.45, %v338
          %v343 = vsel %vm341, 0.45, %v339
          %vm344 = vcmask 7168
          %345 = vst.msk [vmem:[#allocation2] sm:$0xff] %vm344, %v342
          %346 = vst.msk [vmem:[#allocation2 + $0x8] sm:$0xff] %vm344, %v343
        $region108: #{forward.1} parent=95 // pred_fallthru
          _
        %v347 = vld [vmem:[%s261] sm:$0xff]
        %v348 = vld [vmem:[%s261 + $0x8] sm:$0xff]
        %v349 = vld [vmem:[%s261 + $0x10] sm:$0xff]
        %v350 = vld [vmem:[%s261 + $0x18] sm:$0xff]
        %v351 = vld [vmem:[%s261 + $0x20] sm:$0xff]
        %v352 = vld [vmem:[%s261 + $0x28] sm:$0xff]
        %v353 = vld [vmem:[%s268] sm:$0xff]
        %v354 = vld [vmem:[%s268 + $0x8] sm:$0xff]
        %v355 = vld [vmem:[%s268 + $0x10] sm:$0xff]
        %v356 = vld [vmem:[%s268 + $0x18] sm:$0xff]
        %v357 = vld [vmem:[%s268 + $0x20] sm:$0xff]
        %v358 = vld [vmem:[%s268 + $0x28] sm:$0xff]
        %v359 = vxor.u32 %v347, 2147483648
        %v360 = vxor.u32 %v348, 2147483648
        %v361 = vxor.u32 %v349, 2147483648
        %v362 = vmul.f32 %v359, 1.442695
        %v363 = vpow.pop %v362
        %v364 = vmul.f32 %v360, 1.442695
        %v365 = vpow.pop %v364
        %v366 = vmul.f32 %v361, 1.442695
        %v367 = vpow.pop %v366
        %v368 = vadd.f32 %v363, 1.0
        %v369 = vadd.f32 %v365, 1.0
        %v370 = vadd.f32 %v367, 1.0
        %v371 = vrcp.pop %v368
        %v372 = vmul.f32 1.0, %v371
        %v373 = vrcp.pop %v369
        %v374 = vmul.f32 1.0, %v373
        %v375 = vrcp.pop %v370
        %v376 = vmul.f32 1.0, %v375
        %v377 = vtanh.pop %v350
        %v378 = vtanh.pop %v351
        %v379 = vmul.f32 %v377, 1.442695
        %v380 = vpow.pop %v379
        %v381 = vmul.f32 %v378, 1.442695
        %v382 = vpow.pop %v381
        %v383 = vld [vmem:[#allocation2] sm:$0xff]
        %v384 = vld [vmem:[#allocation2 + $0x8] sm:$0xff]
        %386 = vset.pattern.permute.xlu0 0
        %387 = vperm.xlu0 %386, %v383
        %v388 = vpop.permute.xlu0 %387
        %391 = vset.pattern.permute.xlu0 0
        %392 = vperm.xlu0 %391, %v384
        %v393 = vpop.permute.xlu0 %392
        %v395 = vmul.f32 %v380, %v388
        %v396 = vmul.f32 %v382, %v393
        %v397 = vlaneseq
        %v398 = vand.u32 %v397, 127
        %s399 = smul.u32 %s17, 2
        %s400 = sadd.s32 %s399, %s18
        %s401 = smul.u32 %s400, 128
        %v402 = vstv %s401
        %v403 = vadd.s32 %v398, %v402
        %vm404 = vcmp.lt.s32.totalorder %v403, 338
        %v405 = vlaneseq
        %v406 = vshrl.u32 %v405, 7
        %vm407 = vcmp.lt.s32.totalorder %v406, 5
        %vm408 = vcmp.lt.s32.totalorder %v406, 3
        %v409 = vrot.slane %v355, 4
        %v410 = vadd.f32 %v355, %v409
        %v411 = vrot.slane %v410, 2
        %v412 = vadd.f32 %v410, %v411
        %v413 = vrot.slane %v412, 1
        %v414 = vadd.f32 %v412, %v413
        %vm415 = vcmp.gt.f32.partialorder %v414, 0.0
        %vm416 = vmand %vm415, %vm404
        %vm417 = vcmp.eq.f32.partialorder %v414, 0.0
        %vm418 = vmand %vm417, %vm404
        %v419 = vsel %vm418, 1, 0
        %vm420 = vcmp.eq.s32.totalorder %v419, 1
        %v421 = vsel %vm407, 1, 0
        %vm422 = vcmp.eq.s32.totalorder %v421, 1
        %vm423 = vmand %vm420, %vm422
        %v424 = vsub.f32 %v376, %v355
        %v425 = vmul.f32 %v424, %v424
        %v426 = vsel %vm423, %v425, 0.0
        %v427 = vsel %vm408, 1, 0
        %vm428 = vcmp.eq.s32.totalorder %v427, 1
        %v429 = vsel %vm428, %v352, -1e+30
        %v430 = vrot.slane %v429, 4
        %v431 = vmax.f32 %v429, %v430
        %v432 = vrot.slane %v431, 2
        %v433 = vmax.f32 %v431, %v432
        %v434 = vrot.slane %v433, 1
        %v435 = vmax.f32 %v433, %v434
        %v436 = vsub.f32 %v352, %v435
        %v437 = vmul.f32 %v436, 1.442695
        %v438 = vpow.pop %v437
        %v439 = vsel %vm428, %v438, 0.0
        %v440 = vrot.slane %v439, 4
        %v441 = vadd.f32 %v439, %v440
        %v442 = vrot.slane %v441, 2
        %v443 = vadd.f32 %v441, %v442
        %v444 = vrot.slane %v443, 1
        %v445 = vadd.f32 %v443, %v444
        %v446 = vrcp.pop %v445
        %v447 = vmul.f32 %v439, %v446
        %v448 = vsel %vm416, 1, 0
        %vm449 = vcmp.eq.s32.totalorder %v448, 1
        %vm450 = vmand %vm449, %vm428
        %v451 = vsub.f32 %v447, %v358
        %v452 = vmul.f32 %v451, %v451
        %v453 = vsel %vm450, %v452, 0.0
        %v454 = vrot.slane %v355, 4
        %v455 = vmax.f32 %v355, %v454
        %v456 = vrot.slane %v455, 2
        %v457 = vmax.f32 %v455, %v456
        %v458 = vrot.slane %v457, 1
        %v459 = vmax.f32 %v457, %v458
        %vm460 = vcmp.eq.f32.partialorder %v355, %v459
        %v461 = vsel %vm460, %v406, 8
        %v462 = vrot.slane %v461, 4
        %vm463 = vcmp.lt.s32.totalorder %v461, %v462
        %v464 = vsel %vm463, %v461, %v462
        %v465 = vrot.slane %v464, 2
        %vm466 = vcmp.lt.s32.totalorder %v464, %v465
        %v467 = vsel %vm466, %v464, %v465
        %v468 = vrot.slane %v467, 1
        %vm469 = vcmp.lt.s32.totalorder %v467, %v468
        %v470 = vsel %vm469, %v467, %v468
        %vm471 = vcmp.eq.s32.totalorder %v406, %v470
        %vm472 = vcmp.eq.f32.partialorder %v355, 1.0
        %vm473 = vmand %vm471, %vm472
        %vm474 = vmand %vm473, %vm449
        %v475 = vmul.f32 %v372, 32.0
        %v476 = vmul.f32 %v395, 224.0
        %v477 = vsub.f32 %v475, %v476
        %v478 = vmul.f32 %v374, 32.0
        %v479 = vmul.f32 %v396, 224.0
        %v480 = vsub.f32 %v478, %v479
        %v481 = vadd.f32 %v475, %v476
        %v482 = vadd.f32 %v478, %v479
        %v483 = vmul.f32 %v353, 32.0
        %v484 = vmul.f32 %v356, 224.0
        %v485 = vsub.f32 %v483, %v484
        %v486 = vmul.f32 %v354, 32.0
        %v487 = vmul.f32 %v357, 224.0
        %v488 = vsub.f32 %v486, %v487
        %v489 = vadd.f32 %v483, %v484
        %v490 = vadd.f32 %v486, %v487
        %v491 = vsub.f32 %v481, %v477
        %v492 = vsub.f32 %v482, %v480
        %v493 = vmul.f32 %v491, %v492
        %v494 = vsub.f32 %v489, %v485
        %v495 = vsub.f32 %v490, %v488
        %v496 = vmul.f32 %v494, %v495
        %v497 = vmin.f32 %v481, %v489
        %v498 = vmax.f32 %v477, %v485
        %v499 = vsub.f32 %v497, %v498
        %v500 = vmin.f32 %v482, %v490
        %v501 = vmax.f32 %v480, %v488
        %v502 = vsub.f32 %v500, %v501
        %v503 = vmul.f32 %v499, %v502
        %v504 = vadd.f32 %v493, %v496
        %v505 = vsub.f32 %v504, %v503
        %v506 = vadd.f32 %v505, 1e-06
        %v507 = vrcp.pop %v506
        %v508 = vmul.f32 %v503, %v507
        %v509 = vsub.f32 %v477, %v489
        %vm510 = vcmp.ge.f32.partialorder %v509, 0.0
        %v511 = vsub.f32 %v485, %v481
        %vm512 = vcmp.ge.f32.partialorder %v511, 0.0
        %vm513 = vmor %vm510, %vm512
        %v514 = vsub.f32 %v488, %v482
        %vm515 = vcmp.ge.f32.partialorder %v514, 0.0
        %vm516 = vmor %vm513, %vm515
        %v517 = vsub.f32 %v480, %v490
        %vm518 = vcmp.ge.f32.partialorder %v517, 0.0
        %vm519 = vmor %vm516, %vm518
        %v520 = vsel %vm519, 0.0, %v508
        %v521 = vsub.f32 %v372, %v353
        %v522 = vmul.f32 %v521, %v521
        %v523 = vsub.f32 %v374, %v354
        %v524 = vmul.f32 %v523, %v523
        %v525 = vadd.f32 %v522, %v524
        %v526 = vsub.f32 %v395, %v356
        %v527 = vmul.f32 %v526, %v526
        %v528 = vadd.f32 %v525, %v527
        %v529 = vsub.f32 %v396, %v357
        %v530 = vmul.f32 %v529, %v529
        %v531 = vadd.f32 %v528, %v530
        %v532 = vsel %vm474, %v531, 0.0
        %v533 = vsub.f32 %v376, %v520
        %v534 = vmul.f32 %v533, %v533
        %v535 = vsel %vm474, %v534, 0.0
        %v536 = vmul.f32 %v532, 5.0
        %v537 = vmul.f32 %v535, 5.0
        %v538 = vadd.f32 %v536, %v537
        %v539 = vmul.f32 %v426, 0.5
        %v540 = vadd.f32 %v538, %v539
        %v541 = vadd.f32 %v540, %v453
        %v542 = vrot.slane %v541, 4
        %v543 = vadd.f32 %v541, %v542
        %v544 = vrot.slane %v543, 2
        %v545 = vadd.f32 %v543, %v544
        %v546 = vrot.slane %v545, 1
        %v547 = vadd.f32 %v545, %v546
        %v548 = vld [vmem:[%s295] sm:$0x1]
        %v549 = vadd.f32 %v548, %v547
        %550 = vst [vmem:[%s295] sm:$0x1] %v549
        %p551 = scmp.lt.s32.totalorder %s17, 1
        %s552 = scalar_select %p551, %s17, 1
        %s553 = scalar_lea.vmem %s2, %s552
        // Predicated region
        $region109: #{forward.1} parent=95 // pred_check
          %p554 = pneg %p103
        $region110: #{forward.1} parent=95 // pred_check_branch
          %556 = sbr.rel (%p554) target = $region112
        $region111: #{forward.1} parent=95 // pred_region
          _
        $region112: #{forward.1} parent=95 // pred_fallthru
          _
      $region96: #{forward.1} parent=5 // pred_fallthru
        _
      %p557 = scmp.le.s32.totalorder 2, %s8
      // Predicated region
      $region113: #{forward.1} parent=5 // pred_check
        %p558 = pneg %p557
      $region114: #{forward.1} parent=5 // pred_check_branch
        %560 = sbr.rel (%p558) target = $region116
      $region115: #{forward.1} parent=5 // pred_region
        %s561 = ssub.s32 %s8, 2
        // Predicated region
        $region117: #{forward.1} parent=115 // pred_check
          %p562 = pneg %p109
        $region118: #{forward.1} parent=115 // pred_check_branch
          %564 = sbr.rel (%p562) target = $region120
        $region119: #{forward.1} parent=115 // pred_region
          %p565 = scmp.lt.s32.totalorder %s19, 1
          %s566 = scalar_select %p565, %s19, 1
          %s567 = scalar_lea.vmem %s2, %s566
        $region120: #{forward.1} parent=115 // pred_fallthru
          _
      $region116: #{forward.1} parent=5 // pred_fallthru
        _
    $region6: #{forward.1} parent=1 // loop_footer
      %s12 = sadd.s32 1, %s8
    $region7: #{forward.1} parent=1 // loop_footer_branch
      %7 = sbr.rel target = $region3
    $region8: #{forward.1} parent=1 // loop_exit
      _

</llo_original>
